<compile_context>
chip_gen: v5e
topology: v5e:2x2
jax: 0.10.0
libtpu: 0.0.40
codegen_flags: <defaults>
</compile_context>

<pallas_src>
import math

import jax
import jax.numpy as jnp
from jax.experimental import pallas as pl
from jax.experimental.pallas import tpu as pltpu


# ----------------------------------------------------------------------------
# Primary (zero-copy) path.
# ----------------------------------------------------------------------------
def _alias_noop_kernel(x_ref, o_ref):
    # Output buffer IS the input buffer (input_output_aliases={0: 0}); nothing
    # to move.  touch() establishes a fake read+write dep so the aliased
    # output is considered produced by this kernel.
    del x_ref
    pltpu.touch(o_ref)


def _flatten_alias(x2: jax.Array) -> jax.Array:
    n, flat = x2.shape
    return pl.pallas_call(
        _alias_noop_kernel,
        out_shape=jax.ShapeDtypeStruct((n, flat), x2.dtype),
        in_specs=[pl.BlockSpec(memory_space=pl.ANY)],
        out_specs=pl.BlockSpec(memory_space=pl.ANY),
        input_output_aliases={0: 0},
    )(x2)


# ----------------------------------------------------------------------------
# Fallback (explicit copy) path -- only used if the aliased no-op path fails.
# ----------------------------------------------------------------------------
def _copy_kernel(x_ref, o_ref):
    o_ref[...] = x_ref[...]


_BLOCK_BYTES = 1 << 20  # ~1 MiB blocks: 2 in + 2 out buffers = 4 MiB live,
                        # safely inside v5e's 16 MiB / v7x's 32 MiB scoped VMEM.
_VMEM_LIMIT = 32 * 1024 * 1024


def _flatten_copy(x2: jax.Array) -> jax.Array:
    n, flat = x2.shape
    total = n * flat
    itemsize = jnp.dtype(x2.dtype).itemsize

    # Preferred: view the whole tensor as a dense (rows, lanes) slab (free
    # reshape) so every block is one contiguous DMA with full (8,128)
    # occupancy, independent of the batch size N.
    for lanes in (1024, 512, 256, 128):
        if total % lanes == 0:
            rows = total // lanes
            if rows <= 8:
                rb = rows  # full-extent block is always legal
            else:
                rb_budget = max(8, (_BLOCK_BYTES // (lanes * itemsize)) // 8 * 8)
                rb = min(rb_budget, (rows // 8) * 8)
            slab = x2.reshape(rows, lanes)
            out = pl.pallas_call(
                _copy_kernel,
                out_shape=jax.ShapeDtypeStruct((rows, lanes), x2.dtype),
                grid=(pl.cdiv(rows, rb),),
                in_specs=[pl.BlockSpec((rb, lanes), lambda i: (i, 0))],
                out_specs=pl.BlockSpec((rb, lanes), lambda i: (i, 0)),
                compiler_params=pltpu.CompilerParams(
                    dimension_semantics=("parallel",),
                    vmem_limit_bytes=_VMEM_LIMIT,
                ),
            )(slab)
            return out.reshape(n, flat)

    # General shapes (total not a multiple of 128): tile the (n, flat) view
    # directly with a cdiv grid; Pallas clips the ragged tail blocks.
    tf = 512 if flat >= 512 else flat          # multiple of 128, or full dim
    nb = n if n <= 256 else 256                # full dim, or multiple of 8
    return pl.pallas_call(
        _copy_kernel,
        out_shape=jax.ShapeDtypeStruct((n, flat), x2.dtype),
        grid=(pl.cdiv(n, nb), pl.cdiv(flat, tf)),
        in_specs=[pl.BlockSpec((nb, tf), lambda i, j: (i, j))],
        out_specs=pl.BlockSpec((nb, tf), lambda i, j: (i, j)),
        compiler_params=pltpu.CompilerParams(
            dimension_semantics=("parallel", "parallel"),
            vmem_limit_bytes=_VMEM_LIMIT,
        ),
    )(x2)


# ----------------------------------------------------------------------------
# Public wrapper (equivalent of torch `x.view(x.size(0), -1)`).
# ----------------------------------------------------------------------------
def flatten(x: jax.Array) -> jax.Array:
    n = x.shape[0]
    flat = math.prod(x.shape[1:]) if x.ndim > 1 else 1

    # Row-major reshape == torch .view on a contiguous NCHW tensor (W fastest,
    # then H, then C).  Metadata-only for default layouts.
    x2 = x.reshape(n, flat)

    try:
        out = _flatten_alias(x2)
        jax.block_until_ready(out)  # surface any lowering/runtime failure here
        return out
    except Exception:
        # TODO(synk): drop this fallback once the aliased no-op (pl.ANY +
        # pltpu.touch) path is confirmed on all deployed jax/libtpu versions.
        return _flatten_copy(x2)


if __name__ == "__main__":
    key = jax.random.PRNGKey(0)
    # Small NCHW feature map consistent with a conv backbone.
    x = jax.random.normal(key, (2, 4, 16, 16), dtype=jnp.float32)

    y = flatten(x)
    jax.block_until_ready(y)

    ref = x.reshape(x.shape[0], -1)
    assert y.shape == (2, 4 * 16 * 16), y.shape
    assert y.dtype == x.dtype
    assert jnp.array_equal(y, ref), "flatten mismatch vs reference"

    print("KERNEL_OK")
</pallas_src>

<mosaic_0001>
module attributes {stable_mosaic.version = 11 : i64} {
  func.func @_alias_noop_kernel(%arg0: memref<2x1024xf32, #tpu.memory_space<any>>, %arg1: memref<2x1024xf32, #tpu.memory_space<any>>) attributes {dimension_semantics = [], scalar_prefetch = 0 : i64, scratch_operands = 0 : i64, tpu.core_type = #tpu.core_type<tc>} {
    return
  }
}

module attributes {stable_mosaic.version = 11 : i64} {
  func.func @_copy_kernel(%arg0: i32, %arg1: memref<2x1024xf32, #tpu.memory_space<vmem>>, %arg2: memref<2x1024xf32, #tpu.memory_space<vmem>>) attributes {dimension_semantics = [#tpu.dimension_semantics<parallel>], iteration_bounds = array<i64: 1>, scalar_prefetch = 0 : i64, scratch_operands = 0 : i64, tpu.core_type = #tpu.core_type<tc>, window_params = [{transform_indices = @transform_0, window_bounds = array<i64: 2, 1024>}, {transform_indices = @transform_1, window_bounds = array<i64: 2, 1024>}]} {
    %c0 = arith.constant 0 : index
    %c0_0 = arith.constant 0 : index
    %0 = vector.load %arg1[%c0, %c0_0] : memref<2x1024xf32, #tpu.memory_space<vmem>>, vector<2x1024xf32>
    %c0_1 = arith.constant 0 : index
    %c0_2 = arith.constant 0 : index
    %1 = vector.load %arg2[%c0_1, %c0_2] : memref<2x1024xf32, #tpu.memory_space<vmem>>, vector<2x1024xf32>
    tpu.vector_store %arg2[%c0_1, %c0_2], %0 {strides = array<i32>} : memref<2x1024xf32, #tpu.memory_space<vmem>>, vector<2x1024xf32>,
    return
  }
  func.func @transform_0(%arg0: i32) -> (i32, i32) {
    %c0_i32 = arith.constant 0 : i32
    %c0_i32_0 = arith.constant 0 : i32
    return %arg0, %c0_i32 : i32, i32
  }
  func.func @transform_1(%arg0: i32) -> (i32, i32) {
    %c0_i32 = arith.constant 0 : i32
    %c0_i32_0 = arith.constant 0 : i32
    return %arg0, %c0_i32 : i32, i32
  }
}

</mosaic_0001>

<llo_original>
// kernel: tpu_custom_call.1
$region0: #{tpu_custom_call.1}
  #allocation0 [shape = 'u32[]', space=smem, size = 0x4, offset = 0x4, fixed_abs, tag = 'smem constant byte address 0x4 - core index']
  #allocation1 [shape = 'u32[72,128]{1,0:T(1,128)}', space=vmem, size = 0x9000, scoped, tag = 'internal scratch']
  %s0 = inlined_call_operand.hbm [shape: f32[2,1024], index: 0, kind: input, shape index: {}, may-alias: {0,1}]
  %s1 = inlined_call_operand.hbm [shape: f32[2,1024], index: 1, kind: output, shape index: {}, may-alias: {0,1}]
  %s2 = sld [smem:[#allocation0]]
  $region2: #{tpu_custom_call.1} parent=0
    _
  %s4 = ssub.s32 1, %s2
  %s5 = scalar_select 0, %s4, %s2

// kernel: tpu_custom_call.1
$region0: #{tpu_custom_call.1}
  #allocation0 [shape = 'u32[]', space=smem, size = 0x4, offset = 0x4, fixed_abs, tag = 'smem constant byte address 0x4 - core index']
  #allocation1 [shape = 'u32[72,128]{1,0:T(1,128)}', space=vmem, size = 0x9000, scoped, tag = 'internal scratch']
  %s0 = inlined_call_operand.hbm [shape: f32[2,1024], index: 0, kind: input, shape index: {}]
  %s1 = inlined_call_operand.hbm [shape: f32[2,1024], index: 1, kind: output, shape index: {}]
  %s2 = sld [smem:[#allocation0]]
  $region18: #{tpu_custom_call.1} parent=0
    _
  %s4 = ssub.s32 1, %s2
  %s5 = scalar_select 0, %s4, %s2
  $region1: #{tpu_custom_call.1} parent=0
    #allocation2 [shape = 'u8[8192]{0}', space=vmem, size = 0x2000, scoped, tag = 'input window, operand 0, single buffered']
    #allocation3 [shape = 's32[1]{0}', space=sflag, size = 0x4, scoped, tag = 'scoped memory for tpu_custom_call.1']
    #allocation4 [shape = 's32[1]{0}', space=sflag, size = 0x4, scoped, tag = 'scoped memory for tpu_custom_call.1']
    #allocation5 [shape = 'u8[8192]{0}', space=vmem, size = 0x2000, scoped, tag = 'output window, operand 0, single buffered']
    %6 = vsyncpa [#allocation3], 0
    %7 = vsyncpa [#allocation4], 0
    // Predicated region
    $region2: #{tpu_custom_call.1} parent=1 // pred_check
      _
    $region3: #{tpu_custom_call.1} parent=1 // pred_check_branch
      %9 = sbr.rel (0) target = $region5
    $region4: #{tpu_custom_call.1} parent=1 // pred_region
      %11 = vsyncadd [#allocation3], 0
      %s13 = sshll.u32 %s0, 4
      %s14 = int_to_ptr.hbm [resolvable:$true] %s13
      %s15 = sshll.u32 [#allocation2], 4
      %s16 = int_to_ptr.vmem [resolvable:$true] %s15
      %18 = dma.hbm_to_vmem [thread:$0]  %s14, 256, %s16, [#allocation3]
    $region5: #{tpu_custom_call.1} parent=1 // pred_fallthru
      _
    // Predicated region
    $region6: #{tpu_custom_call.1} parent=1 // pred_check
      _
    $region7: #{tpu_custom_call.1} parent=1 // pred_check_branch
      %20 = sbr.rel (0) target = $region9
    $region8: #{tpu_custom_call.1} parent=1 // pred_region
      %22 = dma.done [#allocation3], 256
    $region9: #{tpu_custom_call.1} parent=1 // pred_fallthru
      _
    %v23 = vld [vmem:[#allocation2] sm:$0xff]
    %v24 = vld [vmem:[#allocation2 + $0x8] sm:$0xff]
    %25 = vst [vmem:[#allocation5] sm:$0xff] %v23
    %26 = vst [vmem:[#allocation5 + $0x8] sm:$0xff] %v24
    // Predicated region
    $region10: #{tpu_custom_call.1} parent=1 // pred_check
      _
    $region11: #{tpu_custom_call.1} parent=1 // pred_check_branch
      %28 = sbr.rel (0) target = $region13
    $region12: #{tpu_custom_call.1} parent=1 // pred_region
      %30 = vsyncadd [#allocation4], 0
      %s32 = sshll.u32 [#allocation5], 4
      %s33 = int_to_ptr.vmem [resolvable:$true] %s32
      %s34 = sshll.u32 %s1, 4
      %s35 = int_to_ptr.hbm [resolvable:$true] %s34
      %37 = dma.vmem_to_hbm [thread:$0]  %s33, 256, %s35, [#allocation4]
    $region13: #{tpu_custom_call.1} parent=1 // pred_fallthru
      _
    // Predicated region
    $region14: #{tpu_custom_call.1} parent=1 // pred_check
      _
    $region15: #{tpu_custom_call.1} parent=1 // pred_check_branch
      %39 = sbr.rel (0) target = $region17
    $region16: #{tpu_custom_call.1} parent=1 // pred_region
      %41 = dma.done [#allocation4], 256
    $region17: #{tpu_custom_call.1} parent=1 // pred_fallthru
      _
    %42 = vsyncpa [#allocation3], 1
    %43 = vsyncpa [#allocation4], 1

</llo_original>
